<compile_context>
chip_gen: v6e
topology: v6e:2x2x1
jax: 0.10.0
libtpu: 0.0.40
codegen_flags: <defaults>
</compile_context>

<pallas_src>
import functools

import jax
import jax.numpy as jnp
from jax.experimental import pallas as pl
from jax.experimental.pallas import tpu as pltpu


def _cdiv(a: int, b: int) -> int:
    return (a + b - 1) // b


def _round_up(x: int, m: int) -> int:
    return _cdiv(x, m) * m


def _ce_label_smooth_kernel(nsrc_ref, logits_ref, labels_ref, loss_ref, *,
                            epsilon: float, num_classes: int, block_b: int):
    # logits_ref: (TB, K) float, labels_ref: (TB, 1) int32, loss_ref: (TB, 1) f32,
    # nsrc_ref: (1,) int32 in SMEM (scalar prefetch).
    i = pl.program_id(0)

    x = logits_ref[...].astype(jnp.float32)                      # (TB, K)
    tb, k = x.shape

    # log-softmax pieces: per-row max and exp-sum (rows are independent, so the
    # ragged/garbage rows of a partial last block only pollute themselves).
    m = jnp.max(x, axis=1, keepdims=True)                        # (TB, 1)
    lse = jnp.log(jnp.sum(jnp.exp(x - m), axis=1, keepdims=True))  # (TB, 1)

    # Per-row epsilon: eps for global_row < n_src (if n_src > 0), else eps for all.
    n_src = nsrc_ref[0]
    row = jax.lax.broadcasted_iota(jnp.int32, (tb, 1), 0) + i * block_b
    eps_row = jnp.where(jnp.logical_or(n_src <= 0, row < n_src),
                        jnp.float32(epsilon), jnp.float32(0.0))  # (TB, 1)

    # Single weighted reduction:
    #   loss = -sum_k smoothed_k * log_probs_k
    #        = (m + lse) - sum_k w_k * x_k,   w_k = (1-eps)*onehot_k + eps/K
    # (x[label] silently contributes 0 for out-of-range labels, matching the
    #  one_hot reference behavior.)
    labels = labels_ref[...]                                     # (TB, 1) int32
    inv_k = jnp.float32(1.0 / num_classes)
    base = eps_row * inv_k                                       # (TB, 1)
    col = jax.lax.broadcasted_iota(jnp.int32, (tb, k), 1)
    w = jnp.where(col == labels, (1.0 - eps_row) + base, base)   # (TB, K)
    weighted = jnp.sum(w * x, axis=1, keepdims=True)             # (TB, 1)

    loss_ref[...] = (m + lse) - weighted


def cross_entropy_label_smooth(inputs, targets, n_src=0, *,
                               epsilon=0.1, reduction=True, block_b=None):
    """inputs: (B, K) logits (f32 or bf16), targets: (B,) int labels, n_src: int."""
    B, K = inputs.shape
    itemsize = jnp.dtype(inputs.dtype).itemsize
    # dtype-native sublane multiple: f32 -> 8, bf16 -> 16, int8/fp8 -> 32.
    sub = 32 if itemsize == 1 else (16 if itemsize == 2 else 8)

    # Per-generation VMEM gating: v7x has 64 MiB physical VMEM (and 2 TCs),
    # v5e/v6e have 128 MiB.  Keep scratch well inside the scoped limit.
    try:
        vmem_cap = int(pltpu.get_tpu_info().vmem_capacity_bytes)
    except Exception:  # pragma: no cover - conservative fallback
        vmem_cap = 128 * 1024 * 1024
    small_vmem = vmem_cap <= 64 * 1024 * 1024
    block_budget = (20 if small_vmem else 32) * 1024 * 1024
    vmem_limit = (48 if small_vmem else 64) * 1024 * 1024

    # Per-row costs: VMEM (2x double-buffered raw block + f32 upcast + exp/weight
    # temporaries) and HBM (raw block only).  Target ~4 MiB of logits per step.
    row_vmem = K * (2 * itemsize + 12) + 64
    row_hbm = K * itemsize
    dma_target = 4 * 1024 * 1024

    tb = max(1, block_budget // row_vmem)
    tb = min(tb, max(1, dma_target // row_hbm))
    if small_vmem:
        # Multi-TensorCore part: keep >= ~4 grid steps so both cores get work
        # under dimension_semantics=("parallel",).
        tb = min(tb, max(sub, _round_up(_cdiv(B, 4), sub)))
    if block_b is not None:
        tb = min(tb, int(block_b))
    tb = min(tb, _round_up(B, sub))
    tb = max(sub, (tb // sub) * sub)
    n_blocks = _cdiv(B, tb)

    labels = targets.astype(jnp.int32).reshape(B, 1)
    nsrc_arr = jnp.array([n_src], dtype=jnp.int32)

    kernel = functools.partial(
        _ce_label_smooth_kernel,
        epsilon=float(epsilon), num_classes=int(K), block_b=int(tb))

    # No padding: the last batch tile may be ragged.  Pallas drops out-of-bounds
    # output rows; the garbage input rows only affect their own (dropped) outputs.
    per_row = pl.pallas_call(
        kernel,
        out_shape=jax.ShapeDtypeStruct((B, 1), jnp.float32),
        grid_spec=pltpu.PrefetchScalarGridSpec(
            num_scalar_prefetch=1,                     # n_src lives in SMEM
            grid=(n_blocks,),
            in_specs=[
                pl.BlockSpec((tb, K), lambda i, nsrc: (i, 0)),   # logits tile
                pl.BlockSpec((tb, 1), lambda i, nsrc: (i, 0)),   # labels tile
            ],
            out_specs=pl.BlockSpec((tb, 1), lambda i, nsrc: (i, 0)),
        ),
        compiler_params=pltpu.CompilerParams(
            dimension_semantics=("parallel",),   # rows independent -> 2 TCs on v7x
            vmem_limit_bytes=vmem_limit,
        ),
    )(nsrc_arr, inputs, labels)

    loss = per_row[:, 0]
    return jnp.mean(loss) if reduction else loss


def _reference(inputs, targets, n_src, epsilon=0.1, reduction=True):
    # Pure-JAX reference mirroring the PyTorch forward.
    B, K = inputs.shape
    log_probs = jax.nn.log_softmax(inputs.astype(jnp.float32), axis=1)
    one_hot = jax.nn.one_hot(targets, K, dtype=jnp.float32)
    if n_src > 0:
        eps = epsilon * jnp.concatenate(
            [jnp.ones((n_src, 1)), jnp.zeros((B - n_src, 1))], axis=0)
    else:
        eps = epsilon
    smoothed = (1.0 - eps) * one_hot + eps / K
    loss = jnp.sum(-smoothed * log_probs, axis=1)
    return jnp.mean(loss) if reduction else loss


if __name__ == "__main__":
    key = jax.random.PRNGKey(0)
    k1, k2 = jax.random.split(key)

    B, K = 10, 32          # batch_size=10, num_classes=32
    n_src = 5              # first 5 samples are "source" samples
    logits = jax.random.normal(k1, (B, K), dtype=jnp.float32)
    labels = jax.random.randint(k2, (B,), 0, K, dtype=jnp.int32)

    # Multi-tile path: block_b=8 -> 2 batch tiles, the last one ragged (rows
    # 10..15 out of bounds).  Exercises the block-offset row iota for the n_src
    # mask and the no-pad ragged-tile handling.
    loss = cross_entropy_label_smooth(logits, labels, n_src=n_src,
                                      epsilon=0.1, reduction=True, block_b=8)
    loss = jax.block_until_ready(loss)
    ref = _reference(logits, labels, n_src, epsilon=0.1, reduction=True)
    assert jnp.allclose(loss, ref, atol=1e-5, rtol=1e-5), (loss, ref)

    # Auto tile-size path (no block_b override).
    loss_auto = cross_entropy_label_smooth(logits, labels, n_src=n_src,
                                           epsilon=0.1, reduction=True)
    loss_auto = jax.block_until_ready(loss_auto)
    assert jnp.allclose(loss_auto, ref, atol=1e-5, rtol=1e-5), (loss_auto, ref)

    # n_src=0 / reduction=False branch.
    loss_vec = cross_entropy_label_smooth(logits, labels, n_src=0,
                                          epsilon=0.1, reduction=False, block_b=8)
    loss_vec = jax.block_until_ready(loss_vec)
    ref_vec = _reference(logits, labels, 0, epsilon=0.1, reduction=False)
    assert loss_vec.shape == (B,)
    assert jnp.allclose(loss_vec, ref_vec, atol=1e-5, rtol=1e-5)

    # bf16 logits: kernel DMAs bf16 (half the HBM bytes) and upcasts in-kernel;
    # tile rounds to the bf16-native 16-row sublane multiple.
    logits_bf16 = logits.astype(jnp.bfloat16)
    loss_bf = cross_entropy_label_smooth(logits_bf16, labels, n_src=n_src,
                                         epsilon=0.1, reduction=True, block_b=8)
    loss_bf = jax.block_until_ready(loss_bf)
    ref_bf = _reference(logits_bf16.astype(jnp.float32), labels, n_src,
                        epsilon=0.1, reduction=True)
    assert jnp.allclose(loss_bf, ref_bf, atol=1e-4, rtol=1e-4), (loss_bf, ref_bf)

    print("KERNEL_OK")
</pallas_src>

<mosaic_0001>
module attributes {stable_mosaic.version = 11 : i64} {
  func.func @_ce_label_smooth_kernel(%arg0: i32, %arg1: memref<1xi32, #tpu.memory_space<smem>>, %arg2: memref<8x32xf32, #tpu.memory_space<vmem>>, %arg3: memref<8x1xi32, #tpu.memory_space<vmem>>, %arg4: memref<8x1xf32, #tpu.memory_space<vmem>>) attributes {dimension_semantics = [#tpu.dimension_semantics<parallel>], iteration_bounds = array<i64: 2>, scalar_prefetch = 1 : i64, scratch_operands = 0 : i64, tpu.core_type = #tpu.core_type<tc>, window_params = [{transform_indices = @transform_0, window_bounds = array<i64: 8, 32>}, {transform_indices = @transform_1, window_bounds = array<i64: 8, 1>}, {transform_indices = @transform_2, window_bounds = array<i64: 8, 1>}]} {
    %c0 = arith.constant 0 : index
    %c0_0 = arith.constant 0 : index
    %0 = vector.load %arg2[%c0, %c0_0] : memref<8x32xf32, #tpu.memory_space<vmem>>, vector<8x32xf32>
    %cst = arith.constant dense<0xFF800000> : vector<8xf32>
    %1 = vector.multi_reduction <maximumf>, %0, %cst [1] : vector<8x32xf32> to vector<8xf32>
    %2 = vector.shape_cast %1 : vector<8xf32> to vector<8x1xf32>
    %3 = vector.broadcast %2 : vector<8x1xf32> to vector<8x32xf32>
    %4 = arith.subf %0, %3 : vector<8x32xf32>
    %5 = math.exp %4 : vector<8x32xf32>
    %cst_1 = arith.constant dense<0.000000e+00> : vector<8xf32>
    %6 = vector.multi_reduction <add>, %5, %cst_1 [1] : vector<8x32xf32> to vector<8xf32>
    %7 = vector.shape_cast %6 : vector<8xf32> to vector<8x1xf32>
    %8 = math.log %7 : vector<8x1xf32>
    %c0_2 = arith.constant 0 : index
    %9 = memref.load %arg1[%c0_2] : memref<1xi32, #tpu.memory_space<smem>>
    %10 = tpu.iota {dimensions = array<i32: 0>} : vector<8x1xi32>
    %c8_i32 = arith.constant 8 : i32
    %11 = arith.muli %arg0, %c8_i32 : i32
    %12 = vector.broadcast %11 : i32 to vector<8x1xi32>
    %13 = arith.addi %10, %12 : vector<8x1xi32>
    %c0_i32 = arith.constant 0 : i32
    %14 = arith.cmpi sle, %9, %c0_i32 : i32
    %15 = vector.broadcast %9 : i32 to vector<8x1xi32>
    %16 = arith.cmpi slt, %13, %15 : vector<8x1xi32>
    %17 = vector.broadcast %14 : i1 to vector<8x1xi1>
    %18 = arith.ori %17, %16 : vector<8x1xi1>
    %cst_3 = arith.constant 1.000000e-01 : f32
    %cst_4 = arith.constant 0.000000e+00 : f32
    %19 = vector.broadcast %cst_3 : f32 to vector<8x1xf32>
    %20 = vector.broadcast %cst_4 : f32 to vector<8x1xf32>
    %21 = arith.select %18, %19, %20 : vector<8x1xi1>, vector<8x1xf32>
    %c0_5 = arith.constant 0 : index
    %c0_6 = arith.constant 0 : index
    %22 = vector.load %arg3[%c0_5, %c0_6] : memref<8x1xi32, #tpu.memory_space<vmem>>, vector<8x1xi32>
    %cst_7 = arith.constant 3.125000e-02 : f32
    %23 = vector.broadcast %cst_7 : f32 to vector<8x1xf32>
    %24 = arith.mulf %21, %23 : vector<8x1xf32>
    %25 = tpu.iota {dimensions = array<i32: 1>} : vector<8x32xi32>
    %26 = vector.broadcast %22 : vector<8x1xi32> to vector<8x32xi32>
    %27 = arith.cmpi eq, %25, %26 : vector<8x32xi32>
    %cst_8 = arith.constant 1.000000e+00 : f32
    %28 = vector.broadcast %cst_8 : f32 to vector<8x1xf32>
    %29 = arith.subf %28, %21 : vector<8x1xf32>
    %30 = arith.addf %29, %24 : vector<8x1xf32>
    %31 = vector.shape_cast %30 : vector<8x1xf32> to vector<8x1xf32>
    %32 = vector.broadcast %31 : vector<8x1xf32> to vector<8x32xf32>
    %33 = vector.shape_cast %24 : vector<8x1xf32> to vector<8x1xf32>
    %34 = vector.broadcast %33 : vector<8x1xf32> to vector<8x32xf32>
    %35 = arith.select %27, %32, %34 : vector<8x32xi1>, vector<8x32xf32>
    %36 = arith.mulf %35, %0 : vector<8x32xf32>
    %cst_9 = arith.constant dense<0.000000e+00> : vector<8xf32>
    %37 = vector.multi_reduction <add>, %36, %cst_9 [1] : vector<8x32xf32> to vector<8xf32>
    %38 = vector.shape_cast %37 : vector<8xf32> to vector<8x1xf32>
    %39 = arith.addf %2, %8 : vector<8x1xf32>
    %40 = arith.subf %39, %38 : vector<8x1xf32>
    %c0_10 = arith.constant 0 : index
    %c0_11 = arith.constant 0 : index
    %41 = vector.load %arg4[%c0_10, %c0_11] : memref<8x1xf32, #tpu.memory_space<vmem>>, vector<8x1xf32>
    tpu.vector_store %arg4[%c0_10, %c0_11], %40 {strides = array<i32>} : memref<8x1xf32, #tpu.memory_space<vmem>>, vector<8x1xf32>,
    return
  }
  func.func @transform_0(%arg0: i32, %arg1: memref<1xi32, #tpu.memory_space<smem>>) -> (i32, i32) {
    %c0_i32 = arith.constant 0 : i32
    %c0_i32_0 = arith.constant 0 : i32
    return %arg0, %c0_i32 : i32, i32
  }
  func.func @transform_1(%arg0: i32, %arg1: memref<1xi32, #tpu.memory_space<smem>>) -> (i32, i32) {
    %c0_i32 = arith.constant 0 : i32
    %c0_i32_0 = arith.constant 0 : i32
    return %arg0, %c0_i32 : i32, i32
  }
  func.func @transform_2(%arg0: i32, %arg1: memref<1xi32, #tpu.memory_space<smem>>) -> (i32, i32) {
    %c0_i32 = arith.constant 0 : i32
    %c0_i32_0 = arith.constant 0 : i32
    return %arg0, %c0_i32 : i32, i32
  }
}

</mosaic_0001>

<llo_original>
// kernel: tpu_custom_call.1
$region0: #{tpu_custom_call.1}
  #allocation0 [shape = 'u32[]', space=smem, size = 0x4, offset = 0x4, fixed_abs, tag = 'smem constant byte address 0x4 - core index']
  #allocation1 [shape = 'u32[144,128]{1,0:T(1,128)}', space=vmem, size = 0x12000, scoped, tag = 'internal scratch']
  #allocation2 [shape = 's32[1]{0}', space=sflag, size = 0x4, scoped, tag = 'scoped memory for tpu_custom_call.1']
  #allocation3 [shape = 's32[1]{0:T(128)S(6)}', space=smem, size = 0x200, scoped, tag = 'prefetched SMEM operand 0']
  %s0 = inlined_call_operand.<no memory space> [shape: s32[1], index: 0, kind: input, shape index: {}]
  %s1 = inlined_call_operand.vmem [shape: f32[10,32], index: 1, kind: input, shape index: {}]
  %s2 = inlined_call_operand.vmem [shape: s32[10,1], index: 2, kind: input, shape index: {}]
  %s3 = inlined_call_operand.vmem [shape: f32[10,1], index: 3, kind: output, shape index: {}]
  %s4 = sld [smem:[#allocation0]]
  $region41: #{tpu_custom_call.1} parent=0
    _
  %s6 = ssub.s32 1, %s4
  %s7 = scalar_select 0, %s6, %s4
  %8 = sst [smem:[#allocation3]] %s0
  loop: start=0, step=1, limit=4
  $region2: #{tpu_custom_call.1} parent=0 // loop_pre_header
    _
  $region3: #{tpu_custom_call.1} parent=0 // loop_header
    %s10 = sphi 0, %s14
    %p11 = scmp.ge.s32.totalorder %s10, 4
    %s20 = sphi 0, %s22
    %s23 = sphi 0, %s20
    %s24 = sphi 0, %s23
    %s40 = sphi 0, %s24
    %s46 = sphi 0, %s48
    %s49 = sphi 0, %s46
    %s50 = sphi 0, %s49
    %s66 = sphi 0, %s50
    %s72 = sphi 0, %s74
    %s75 = sphi 0, %s72
    %s76 = sphi 0, %s75
    %s92 = sphi 0, %s76
  $region4: #{tpu_custom_call.1} parent=0 // loop_header_branch
    %13 = sbr.rel (%p11) target = $region8
  $region5: #{tpu_custom_call.1} parent=0 // loop_body
    %s15 = ssub.s32 %s10, 1
    %s16 = ssub.s32 %s10, 2
    %s17 = sadd.s32 %s10, 1
    %s18 = ssub.s32 %s10, %s17
    %p19 = scmp.eq.s32.totalorder %s18, 0
    %s21 = sadd.s32 %s20, 1
    %s22 = scalar_select %p19, %s20, %s21
    %p25 = pneg %p19
    %p26 = scmp.eq.s32.totalorder %s10, 1
    %p27 = por %p25, %p26
    %p28 = scmp.ne.s32.totalorder %s20, %s23
    %p29 = scmp.eq.s32.totalorder %s10, 0
    %p30 = por %p28, %p29
    %p31 = scmp.ne.s32.totalorder %s20, %s23
    %p32 = scmp.eq.s32.totalorder %s15, 1
    %p33 = por %p31, %p32
    %p34 = scmp.ne.s32.totalorder %s23, %s24
    %p35 = scmp.eq.s32.totalorder %s15, 0
    %p36 = por %p34, %p35
    %p37 = scmp.ne.s32.totalorder %s23, %s24
    %p38 = scmp.eq.s32.totalorder %s16, 1
    %p39 = por %p37, %p38
    %p41 = scmp.ne.s32.totalorder %s24, %s40
    %p42 = scmp.eq.s32.totalorder %s16, 0
    %p43 = por %p41, %p42
    %s44 = ssub.s32 %s10, %s17
    %p45 = scmp.eq.s32.totalorder %s44, 0
    %s47 = sadd.s32 %s46, 1
    %s48 = scalar_select %p45, %s46, %s47
    %p51 = pneg %p45
    %p52 = scmp.eq.s32.totalorder %s10, 1
    %p53 = por %p51, %p52
    %p54 = scmp.ne.s32.totalorder %s46, %s49
    %p55 = scmp.eq.s32.totalorder %s10, 0
    %p56 = por %p54, %p55
    %p57 = scmp.ne.s32.totalorder %s46, %s49
    %p58 = scmp.eq.s32.totalorder %s15, 1
    %p59 = por %p57, %p58
    %p60 = scmp.ne.s32.totalorder %s49, %s50
    %p61 = scmp.eq.s32.totalorder %s15, 0
    %p62 = por %p60, %p61
    %p63 = scmp.ne.s32.totalorder %s49, %s50
    %p64 = scmp.eq.s32.totalorder %s16, 1
    %p65 = por %p63, %p64
    %p67 = scmp.ne.s32.totalorder %s50, %s66
    %p68 = scmp.eq.s32.totalorder %s16, 0
    %p69 = por %p67, %p68
    %s70 = ssub.s32 %s10, %s17
    %p71 = scmp.eq.s32.totalorder %s70, 0
    %s73 = sadd.s32 %s72, 1
    %s74 = scalar_select %p71, %s72, %s73
    %p77 = pneg %p71
    %p78 = scmp.eq.s32.totalorder %s10, 1
    %p79 = por %p77, %p78
    %p80 = scmp.ne.s32.totalorder %s72, %s75
    %p81 = scmp.eq.s32.totalorder %s10, 0
    %p82 = por %p80, %p81
    %p83 = scmp.ne.s32.totalorder %s72, %s75
    %p84 = scmp.eq.s32.totalorder %s15, 1
    %p85 = por %p83, %p84
    %p86 = scmp.ne.s32.totalorder %s75, %s76
    %p87 = scmp.eq.s32.totalorder %s15, 0
    %p88 = por %p86, %p87
    %p89 = scmp.ne.s32.totalorder %s75, %s76
    %p90 = scmp.eq.s32.totalorder %s16, 1
    %p91 = por %p89, %p90
    %p93 = scmp.ne.s32.totalorder %s76, %s92
    %p94 = scmp.eq.s32.totalorder %s16, 0
    %p95 = por %p93, %p94
    %p96 = scmp.le.s32.totalorder 1, %s10
    %p97 = scmp.lt.s32.totalorder %s10, 3
    %p98 = pnand %p96, %p97
    %p99 = pneg %p98
    // Predicated region
    $region9: #{tpu_custom_call.1} parent=5 // pred_check
      _
    $region10: #{tpu_custom_call.1} parent=5 // pred_check_branch
      %101 = sbr.rel (%p98) target = $region12
    $region11: #{tpu_custom_call.1} parent=5 // pred_region
      %s102 = ssub.s32 %s10, 1
    $region12: #{tpu_custom_call.1} parent=5 // pred_fallthru
      _
    %p103 = scmp.lt.s32.totalorder %s10, 2
    // Predicated region
    $region13: #{tpu_custom_call.1} parent=5 // pred_check
      %p104 = pneg %p103
    $region14: #{tpu_custom_call.1} parent=5 // pred_check_branch
      %106 = sbr.rel (%p104) target = $region16
    $region15: #{tpu_custom_call.1} parent=5 // pred_region
      // Predicated region
      $region17: #{tpu_custom_call.1} parent=15 // pred_check
        %p107 = pneg %p30
      $region18: #{tpu_custom_call.1} parent=15 // pred_check_branch
        %109 = sbr.rel (%p107) target = $region20
      $region19: #{tpu_custom_call.1} parent=15 // pred_region
        %p110 = scmp.lt.s32.totalorder %s10, 1
        %s111 = scalar_select %p110, %s10, 1
        %s112 = smul.addr %s111, 8
        %s113 = scalar_lea.vmem %s1, %s112
      $region20: #{tpu_custom_call.1} parent=15 // pred_fallthru
        _
      // Predicated region
      $region21: #{tpu_custom_call.1} parent=15 // pred_check
        %p114 = pneg %p56
      $region22: #{tpu_custom_call.1} parent=15 // pred_check_branch
        %116 = sbr.rel (%p114) target = $region24
      $region23: #{tpu_custom_call.1} parent=15 // pred_region
        %p117 = scmp.lt.s32.totalorder %s10, 1
        %s118 = scalar_select %p117, %s10, 1
        %s119 = smul.addr %s118, 8
        %s120 = scalar_lea.vmem %s2, %s119
      $region24: #{tpu_custom_call.1} parent=15 // pred_fallthru
        _
    $region16: #{tpu_custom_call.1} parent=5 // pred_fallthru
      _
    %p121 = scmp.le.s32.totalorder 1, %s10
    %p122 = scmp.lt.s32.totalorder %s10, 3
    %p123 = pnand %p121, %p122
    %p124 = pneg %p123
    // Predicated region
    $region25: #{tpu_custom_call.1} parent=5 // pred_check
      _
    $region26: #{tpu_custom_call.1} parent=5 // pred_check_branch
      %126 = sbr.rel (%p123) target = $region28
    $region27: #{tpu_custom_call.1} parent=5 // pred_region
      %s127 = ssub.s32 %s10, 1
      %p128 = scmp.lt.s32.totalorder %s15, 1
      %s129 = scalar_select %p128, %s15, 1
      %s130 = smul.addr %s129, 8
      %s131 = scalar_lea.vmem %s1, %s130
      %p132 = pneg %p36
      %p133 = pneg %p33
      %p134 = scmp.lt.s32.totalorder %s15, 1
      %s135 = scalar_select %p134, %s15, 1
      %s136 = smul.addr %s135, 8
      %s137 = scalar_lea.vmem %s2, %s136
      %p138 = pneg %p62
      %p139 = pneg %p59
      %p140 = pneg %p88
      %p141 = pneg %p85
      %p142 = scmp.lt.s32.totalorder %s15, 1
      %s143 = scalar_select %p142, %s15, 1
      %s144 = smul.addr %s143, 8
      %s145 = scalar_lea.vmem %s3, %s144
      %p146 = scmp.lt.s32.totalorder %s15, 1
      %s147 = scalar_select %p146, %s15, 1
      %s148 = smul.addr %s147, 8
      %s149 = scalar_lea.vmem %s1, %s148
      %p150 = scmp.lt.s32.totalorder %s15, 1
      %s151 = scalar_select %p150, %s15, 1
      %s152 = smul.addr %s151, 8
      %s153 = scalar_lea.vmem %s2, %s152
      %p154 = scmp.lt.s32.totalorder %s15, 1
      %s155 = scalar_select %p154, %s15, 1
      %s156 = smul.addr %s155, 8
      %s157 = scalar_lea.vmem %s3, %s156
      %v158 = vld [vmem:[%s149] sm:$0xff]
      %vm159 = vcmask 261120
      %v160 = vsel %vm159, %v158, -inf
      %161 = vmax.xlane.f32.xlu0 %v160
      %v162 = vpop.xlane.xlu0 %161
      %v163 = vsub.f32 %v158, %v162
      %v164 = vmul.f32 %v163, 1.442695
      %v165 = vpow.pop %v164
      %v166 = vsel %vm159, %v165, 0.0
      %167 = vadd.xlane.f32.xlu0 %v166
      %v168 = vpop.xlane.xlu0 %167
      %v169 = vlog2.pop %v168
      %v170 = vmul.f32 %v169, 0.6931472
      %s171 = sld [smem:[#allocation3]]
      %v172 = vlaneseq
      %v173 = vshrl.u32 %v172, 7
      %s174 = smul.u32 %s15, 8
      %v175 = vstv %s174
      %v176 = vadd.s32 %v173, %v175
      %p177 = scmp.le.s32.totalorder %s171, 0
      %v178 = vstv %s171
      %vm179 = vcmp.lt.s32.totalorder %v176, %v178
      %s180 = scalar_select %p177, 1, 0
      %v181 = vstv %s180
      %vm182 = vcmp.eq.s32.totalorder %v181, 1
      %vm183 = vmor %vm182, %vm179
      %v184 = vsel %vm183, 0.1, 0.0
      %v185 = vld [vmem:[%s153] sm:$0xff]
      %v186 = vmul.f32 %v184, 0.03125
      %v187 = vlaneseq
      %v188 = vand.u32 %v187, 127
      %189 = vset.pattern.permute.xlu0 0
      %190 = vperm.xlu0 %189, %v185
      %v191 = vpop.permute.xlu0 %190
      %vm192 = vcmp.eq.s32.totalorder %v188, %v191
      %v193 = vsub.f32 1.0, %v184
      %v194 = vadd.f32 %v193, %v186
      %v195 = vsel %vm192, %v194, %v186
      %v196 = vmul.f32 %v195, %v158
      %v197 = vsel %vm159, %v196, 0.0
      %198 = vadd.xlane.f32.xlu0 %v197
      %v199 = vpop.xlane.xlu0 %198
      %v200 = vadd.f32 %v162, %v170
      %v201 = vsub.f32 %v200, %v199
      %vm202 = vcmask 7168
      %203 = vst.msk [vmem:[%s157] sm:$0xff] %vm202, %v201
      %p204 = scmp.lt.s32.totalorder %s15, 1
      %s205 = scalar_select %p204, %s15, 1
      %s206 = smul.addr %s205, 8
      %s207 = scalar_lea.vmem %s3, %s206
      // Predicated region
      $region29: #{tpu_custom_call.1} parent=27 // pred_check
        %p208 = pneg %p85
      $region30: #{tpu_custom_call.1} parent=27 // pred_check_branch
        %210 = sbr.rel (%p208) target = $region32
      $region31: #{tpu_custom_call.1} parent=27 // pred_region
        _
      $region32: #{tpu_custom_call.1} parent=27 // pred_fallthru
        _
    $region28: #{tpu_custom_call.1} parent=5 // pred_fallthru
      _
    %p211 = scmp.le.s32.totalorder 2, %s10
    // Predicated region
    $region33: #{tpu_custom_call.1} parent=5 // pred_check
      %p212 = pneg %p211
    $region34: #{tpu_custom_call.1} parent=5 // pred_check_branch
      %214 = sbr.rel (%p212) target = $region36
    $region35: #{tpu_custom_call.1} parent=5 // pred_region
      %s215 = ssub.s32 %s10, 2
      // Predicated region
      $region37: #{tpu_custom_call.1} parent=35 // pred_check
        %p216 = pneg %p91
      $region38: #{tpu_custom_call.1} parent=35 // pred_check_branch
        %218 = sbr.rel (%p216) target = $region40
      $region39: #{tpu_custom_call.1} parent=35 // pred_region
        %p219 = scmp.lt.s32.totalorder %s16, 1
        %s220 = scalar_select %p219, %s16, 1
        %s221 = smul.addr %s220, 8
        %s222 = scalar_lea.vmem %s3, %s221
      $region40: #{tpu_custom_call.1} parent=35 // pred_fallthru
        _
    $region36: #{tpu_custom_call.1} parent=5 // pred_fallthru
      _
  $region6: #{tpu_custom_call.1} parent=0 // loop_footer
    %s14 = sadd.s32 1, %s10
  $region7: #{tpu_custom_call.1} parent=0 // loop_footer_branch
    %9 = sbr.rel target = $region3
  $region8: #{tpu_custom_call.1} parent=0 // loop_exit
    _

</llo_original>
